<compile_context>
chip_gen: v6e
topology: v6e:2x2x1
jax: 0.10.0
libtpu: 0.0.40
codegen_flags: <defaults>
</compile_context>

<pallas_src>
import functools

import jax
import jax.numpy as jnp
from jax.experimental import pallas as pl
from jax.experimental.pallas import tpu as pltpu


def _round_up(v, m):
    return ((v + m - 1) // m) * m


def _pad_dim(d):
    # 128-lane minimum; 256-deep contractions fill the 2x256^2 MXUs on v6e/v7x.
    return _round_up(d, 256) if d >= 256 else _round_up(d, 128)


def _pad2(a, rows, cols, dtype):
    return jnp.pad(a, ((0, rows - a.shape[0]), (0, cols - a.shape[1]))).astype(dtype)


def _invariant_spec(shape):
    """Full-array, grid-invariant input: single-buffered (block never changes)."""
    ndim = len(shape)
    idx = lambda b, j: (0,) * ndim
    try:
        return pl.BlockSpec(shape, idx, pipeline_mode=pl.Buffered(1))
    except (TypeError, AttributeError):   # older jax without pipeline_mode support
        return pl.BlockSpec(shape, idx)


def abmil_kernel(x_ref, smat_ref,
                 w1_ref, b1_ref, w2_ref, b2_ref, w3_ref, b3_ref,
                 wa1_ref, ba1_ref, wa2_ref,
                 wc_ref, bc_ref,
                 out_ref,
                 m_sc, l_sc, acc_sc,
                 *, bt, nt, n_valid, dp):
    j = pl.program_id(1)
    nc = pl.num_programs(1)
    rows = bt * nt
    bf16 = jnp.bfloat16

    # ---- init per-bag online-softmax state at the first instance chunk ----
    @pl.when(j == 0)
    def _():
        m_sc[...] = jnp.full_like(m_sc, -1e30)
        l_sc[...] = jnp.zeros_like(l_sc)
        acc_sc[...] = jnp.zeros_like(acc_sc)

    # (Bt, Nt, Dp) -> (Bt*Nt, Dp): Nt is a multiple of 8, so this only collapses
    # leading dims (lane-dense MXU slab, no per-bag degenerate matmuls).
    x = x_ref[...].reshape(rows, dp)                                   # bf16

    # ---- MLP: 3 linears with ReLU (bf16 operands, f32 accumulation) ----
    h = jnp.maximum(
        jnp.dot(x, w1_ref[...], preferred_element_type=jnp.float32) + b1_ref[...], 0.0)
    h = jnp.maximum(
        jnp.dot(h.astype(bf16), w2_ref[...], preferred_element_type=jnp.float32)
        + b2_ref[...], 0.0)
    feat = jnp.dot(h.astype(bf16), w3_ref[...],
                   preferred_element_type=jnp.float32) + b3_ref[...]   # (rows, Dp) f32

    # ---- Attn_Net: Linear -> tanh -> Linear(H,1) ----
    a = jnp.tanh(
        jnp.dot(feat.astype(bf16), wa1_ref[...],
                preferred_element_type=jnp.float32) + ba1_ref[...])    # (rows, Hp) f32
    # score = <a, wa2> as a lane reduce (wa2 is a (1, Hp) row); ba2 dropped — softmax
    # is shift-invariant so it cancels exactly.
    scores = jnp.sum(a * wa2_ref[...], axis=-1, keepdims=True)         # (rows, 1) f32

    # ---- online per-bag softmax over instance chunks ----
    # Mask instances past the true bag length (zero-padded rows must not contribute).
    inst = jax.lax.broadcasted_iota(jnp.int32, (nt, 1), 0) + j * nt
    valid = inst < n_valid                                             # (nt, 1) bool
    neg = jnp.float32(-1e30)

    # Exact per-bag chunk max (static unroll over the Bt bags of this block).
    m_parts = []
    for b in range(bt):
        sb = scores[b * nt:(b + 1) * nt, :]
        m_parts.append(jnp.max(jnp.where(valid, sb, neg), axis=0, keepdims=True))
    m_chunk = jnp.concatenate(m_parts, axis=0)                         # (bt, 1)

    m_new = jnp.maximum(m_sc[...], m_chunk)                            # (bt, 1)
    alpha = jnp.exp(m_sc[...] - m_new)                                 # (bt, 1) rescale

    e_parts = []
    for b in range(bt):
        sb = scores[b * nt:(b + 1) * nt, :]
        e_parts.append(jnp.where(valid, jnp.exp(sb - m_new[b:b + 1, :]), 0.0))
    e = jnp.concatenate(e_parts, axis=0)                               # (rows, 1) f32

    # Per-bag sum(e) and sum(e*feat) fused into ONE block-diagonal MXU matmul:
    # the e column is broadcast across one full 128-lane tile so every block stays
    # a clean multiple of 128 lanes.
    g = jnp.concatenate(
        [(e * feat).astype(bf16),
         jnp.broadcast_to(e, (rows, 128)).astype(bf16)], axis=-1)      # (rows, Dp+128)
    ps = jnp.dot(smat_ref[...], g, preferred_element_type=jnp.float32)  # (bt, Dp+128)

    acc_sc[...] = acc_sc[...] * alpha + ps[:, :dp]
    l_sc[...] = l_sc[...] * alpha + ps[:, dp:dp + 1]
    m_sc[...] = m_new

    # ---- finalize: softmax normalize + classifier ----
    @pl.when(j == nc - 1)
    def _():
        pooled = acc_sc[...] / l_sc[...]                               # (bt, Dp)
        logits = jnp.dot(pooled.astype(bf16), wc_ref[...],
                         preferred_element_type=jnp.float32) + bc_ref[...]
        out_ref[...] = logits.astype(out_ref.dtype)


def abmil_forward(x, params, *, block_bags=8, block_instances=128):
    """x: (B, N, D) float32. Returns logits (B, C) float32."""
    B, N, D = x.shape
    H = params["w1"].shape[1]
    C = params["wc"].shape[1]

    Dp = _pad_dim(D)
    Hp = _pad_dim(H)
    Cp = _round_up(C, 128)

    # Bags per grid step: Bt == B for small batches (block == full dim is legal),
    # otherwise a multiple of 8 so the (Bt, Cp) output block is (8,128)-friendly.
    # For B > block_bags this also yields >= 2 parallel steps (v7x two-TC sharding).
    Bt = B if B <= block_bags else block_bags
    Bp = _round_up(B, Bt)

    # Instance chunk: multiple of 8 sublanes so the in-kernel (Bt,Nt,Dp)->(Bt*Nt,Dp)
    # flatten is layout-free; the online softmax keeps only one chunk resident.
    Nt = min(_round_up(N, 8), _round_up(block_instances, 8))
    Np = _round_up(N, Nt)
    Nc = Np // Nt

    bf = jnp.bfloat16
    f32 = jnp.float32

    # Pad once outside the kernel; cast the big streamed tensor (x) and all matmul
    # weights to bf16 (halves HBM DMA + VMEM, 2x MXU on v6e/v7x). Biases stay f32.
    xp = jnp.pad(x, ((0, Bp - B), (0, Np - N), (0, Dp - D))).astype(bf)
    pw = {
        "w1": _pad2(params["w1"], Dp, Hp, bf),   "b1": _pad2(params["b1"], 1, Hp, f32),
        "w2": _pad2(params["w2"], Hp, Hp, bf),   "b2": _pad2(params["b2"], 1, Hp, f32),
        "w3": _pad2(params["w3"], Hp, Dp, bf),   "b3": _pad2(params["b3"], 1, Dp, f32),
        "wa1": _pad2(params["wa1"], Dp, Hp, bf), "ba1": _pad2(params["ba1"], 1, Hp, f32),
        "wa2": _pad2(params["wa2"].T, 1, Hp, f32),   # (1, Hp) row for the lane reduce
        "wc": _pad2(params["wc"], Dp, Cp, bf),   "bc": _pad2(params["bc"], 1, Cp, f32),
    }
    order = ("w1", "b1", "w2", "b2", "w3", "b3", "wa1", "ba1", "wa2", "wc", "bc")

    # Block-diagonal bag-summing matrix S[b, b*Nt + i] = 1, hoisted out of the kernel.
    s_mat = jnp.repeat(jnp.eye(Bt, dtype=f32), Nt, axis=1).astype(bf)   # (Bt, Bt*Nt)

    in_specs = ([pl.BlockSpec((Bt, Nt, Dp), lambda b, j: (b, j, 0)),
                 _invariant_spec(s_mat.shape)]
                + [_invariant_spec(pw[k].shape) for k in order])

    kernel = functools.partial(abmil_kernel, bt=Bt, nt=Nt, n_valid=N, dp=Dp)

    # Explicit VMEM budget: single-buffered weights + double-buffered x block +
    # live f32 intermediates + scratch, with generous headroom.
    rows = Bt * Nt
    weight_bytes = sum(int(pw[k].size) * pw[k].dtype.itemsize for k in order)
    weight_bytes += int(s_mat.size) * 2
    x_block_bytes = 2 * rows * Dp * 2                       # bf16, double-buffered
    interm_bytes = 8 * rows * max(Dp, Hp) * 4               # h / feat / a / g / e*feat
    scratch_bytes = Bt * (Dp + 2) * 4 + 2 * Bt * Cp * 4
    est = weight_bytes + x_block_bytes + interm_bytes + scratch_bytes
    vmem_limit = int(min(112 * 2**20, max(32 * 2**20, 2 * est)))

    out = pl.pallas_call(
        kernel,
        out_shape=jax.ShapeDtypeStruct((Bp, Cp), jnp.float32),
        grid_spec=pltpu.PrefetchScalarGridSpec(
            num_scalar_prefetch=0,
            grid=(Bp // Bt, Nc),
            in_specs=in_specs,
            out_specs=pl.BlockSpec((Bt, Cp), lambda b, j: (b, 0)),
            scratch_shapes=[pltpu.VMEM((Bt, 1), jnp.float32),    # running max m
                            pltpu.VMEM((Bt, 1), jnp.float32),    # running denom l
                            pltpu.VMEM((Bt, Dp), jnp.float32)],  # pooled accumulator
        ),
        compiler_params=pltpu.CompilerParams(
            dimension_semantics=("parallel", "arbitrary"),
            vmem_limit_bytes=vmem_limit),
    )(xp, s_mat, *(pw[k] for k in order))

    return out[:B, :C]


def make_params(key, features_dim, hidden_dim, num_classes):
    ks = jax.random.split(key, 13)
    sc = 0.05
    return {
        # MLP: D -> H -> H -> D
        "w1": jax.random.normal(ks[0], (features_dim, hidden_dim), jnp.float32) * sc,
        "b1": jax.random.normal(ks[1], (1, hidden_dim), jnp.float32) * sc,
        "w2": jax.random.normal(ks[2], (hidden_dim, hidden_dim), jnp.float32) * sc,
        "b2": jax.random.normal(ks[3], (1, hidden_dim), jnp.float32) * sc,
        "w3": jax.random.normal(ks[4], (hidden_dim, features_dim), jnp.float32) * sc,
        "b3": jax.random.normal(ks[5], (1, features_dim), jnp.float32) * sc,
        # Attn_Net: D -> H (tanh) -> 1
        "wa1": jax.random.normal(ks[6], (features_dim, hidden_dim), jnp.float32) * sc,
        "ba1": jax.random.normal(ks[7], (1, hidden_dim), jnp.float32) * sc,
        "wa2": jax.random.normal(ks[8], (hidden_dim, 1), jnp.float32) * sc,
        "ba2": jax.random.normal(ks[9], (1, 1), jnp.float32) * sc,
        # classifier: D -> C
        "wc": jax.random.normal(ks[10], (features_dim, num_classes), jnp.float32) * sc,
        "bc": jax.random.normal(ks[11], (1, num_classes), jnp.float32) * sc,
    }


def abmil_reference(x, p):
    """Pure-JAX f32 reference mirroring the PyTorch forward (return_attn=False)."""
    h = jnp.maximum(x @ p["w1"] + p["b1"], 0.0)
    h = jnp.maximum(h @ p["w2"] + p["b2"], 0.0)
    feat = h @ p["w3"] + p["b3"]                                  # (B, N, D)
    a = jnp.tanh(feat @ p["wa1"] + p["ba1"])                      # (B, N, H)
    raw = a @ p["wa2"] + p["ba2"]                                 # (B, N, 1)
    raw_t = jnp.swapaxes(raw, -2, -1)                             # (B, 1, N)
    attn = jax.nn.softmax(raw_t, axis=-1)                         # (B, 1, N)
    pooled = jnp.squeeze(attn @ feat, axis=1)                     # (B, D)
    return pooled @ p["wc"] + p["bc"]                             # (B, C)


if __name__ == "__main__":
    # Small shapes: batch=2 bags, N=8 instances per bag, features_dim=32,
    # hidden_dim=32, num_classes=4.
    B, N, D, H, C = 2, 8, 32, 32, 4
    key = jax.random.PRNGKey(0)
    kx, kp = jax.random.split(key)
    x = jax.random.normal(kx, (B, N, D), jnp.float32)
    params = make_params(kp, D, H, C)

    out = abmil_forward(x, params)
    out = jax.block_until_ready(out)

    ref = abmil_reference(x, params)
    assert out.shape == (B, C)
    # bf16 MXU operands -> compare against the f32 reference with a bf16-appropriate tolerance.
    assert jnp.allclose(out, ref, atol=2e-2, rtol=2e-2), (out, ref)
    print("KERNEL_OK")
</pallas_src>

<mosaic_0001>
module attributes {stable_mosaic.version = 11 : i64} {
  func.func @abmil_kernel(%arg0: i32, %arg1: i32, %arg2: memref<2x8x128xbf16, #tpu.memory_space<vmem>>, %arg3: memref<2x16xbf16, #tpu.memory_space<vmem>>, %arg4: memref<128x128xbf16, #tpu.memory_space<vmem>>, %arg5: memref<1x128xf32, #tpu.memory_space<vmem>>, %arg6: memref<128x128xbf16, #tpu.memory_space<vmem>>, %arg7: memref<1x128xf32, #tpu.memory_space<vmem>>, %arg8: memref<128x128xbf16, #tpu.memory_space<vmem>>, %arg9: memref<1x128xf32, #tpu.memory_space<vmem>>, %arg10: memref<128x128xbf16, #tpu.memory_space<vmem>>, %arg11: memref<1x128xf32, #tpu.memory_space<vmem>>, %arg12: memref<1x128xf32, #tpu.memory_space<vmem>>, %arg13: memref<128x128xbf16, #tpu.memory_space<vmem>>, %arg14: memref<1x128xf32, #tpu.memory_space<vmem>>, %arg15: memref<2x128xf32, #tpu.memory_space<vmem>>, %arg16: memref<2x1xf32, #tpu.memory_space<vmem>>, %arg17: memref<2x1xf32, #tpu.memory_space<vmem>>, %arg18: memref<2x128xf32, #tpu.memory_space<vmem>>) attributes {dimension_semantics = [#tpu.dimension_semantics<parallel>, #tpu.dimension_semantics<arbitrary>], iteration_bounds = array<i64: 1, 1>, scalar_prefetch = 0 : i64, scratch_operands = 3 : i64, tpu.core_type = #tpu.core_type<tc>, window_params = [{transform_indices = @transform_0, window_bounds = array<i64: 2, 8, 128>}, {pipeline_mode = #tpu.pipeline_mode<synchronous>, transform_indices = @transform_1, window_bounds = array<i64: 2, 16>}, {pipeline_mode = #tpu.pipeline_mode<synchronous>, transform_indices = @transform_2, window_bounds = array<i64: 128, 128>}, {pipeline_mode = #tpu.pipeline_mode<synchronous>, transform_indices = @transform_3, window_bounds = array<i64: 1, 128>}, {pipeline_mode = #tpu.pipeline_mode<synchronous>, transform_indices = @transform_4, window_bounds = array<i64: 128, 128>}, {pipeline_mode = #tpu.pipeline_mode<synchronous>, transform_indices = @transform_5, window_bounds = array<i64: 1, 128>}, {pipeline_mode = #tpu.pipeline_mode<synchronous>, transform_indices = @transform_6, window_bounds = array<i64: 128, 128>}, {pipeline_mode = #tpu.pipeline_mode<synchronous>, transform_indices = @transform_7, window_bounds = array<i64: 1, 128>}, {pipeline_mode = #tpu.pipeline_mode<synchronous>, transform_indices = @transform_8, window_bounds = array<i64: 128, 128>}, {pipeline_mode = #tpu.pipeline_mode<synchronous>, transform_indices = @transform_9, window_bounds = array<i64: 1, 128>}, {pipeline_mode = #tpu.pipeline_mode<synchronous>, transform_indices = @transform_10, window_bounds = array<i64: 1, 128>}, {pipeline_mode = #tpu.pipeline_mode<synchronous>, transform_indices = @transform_11, window_bounds = array<i64: 128, 128>}, {pipeline_mode = #tpu.pipeline_mode<synchronous>, transform_indices = @transform_12, window_bounds = array<i64: 1, 128>}, {transform_indices = @transform_13, window_bounds = array<i64: 2, 128>}]} {
    %c0_i32 = arith.constant 0 : i32
    %0 = arith.cmpi eq, %arg1, %c0_i32 : i32
    %1 = arith.extui %0 : i1 to i32
    %c0_i32_0 = arith.constant 0 : i32
    %2 = arith.cmpi ne, %1, %c0_i32_0 : i32
    scf.if %2 {
      %cst_53 = arith.constant -1.000000e+30 : f32
      %99 = vector.broadcast %cst_53 : f32 to vector<2x1xf32>
      %c0_54 = arith.constant 0 : index
      %c0_55 = arith.constant 0 : index
      %100 = vector.load %arg16[%c0_54, %c0_55] : memref<2x1xf32, #tpu.memory_space<vmem>>, vector<2x1xf32>
      tpu.vector_store %arg16[%c0_54, %c0_55], %99 {strides = array<i32>} : memref<2x1xf32, #tpu.memory_space<vmem>>, vector<2x1xf32>,
      %cst_56 = arith.constant 0.000000e+00 : f32
      %101 = vector.broadcast %cst_56 : f32 to vector<2x1xf32>
      %c0_57 = arith.constant 0 : index
      %c0_58 = arith.constant 0 : index
      %102 = vector.load %arg17[%c0_57, %c0_58] : memref<2x1xf32, #tpu.memory_space<vmem>>, vector<2x1xf32>
      tpu.vector_store %arg17[%c0_57, %c0_58], %101 {strides = array<i32>} : memref<2x1xf32, #tpu.memory_space<vmem>>, vector<2x1xf32>,
      %cst_59 = arith.constant 0.000000e+00 : f32
      %103 = vector.broadcast %cst_59 : f32 to vector<2x128xf32>
      %c0_60 = arith.constant 0 : index
      %c0_61 = arith.constant 0 : index
      %104 = vector.load %arg18[%c0_60, %c0_61] : memref<2x128xf32, #tpu.memory_space<vmem>>, vector<2x128xf32>
      tpu.vector_store %arg18[%c0_60, %c0_61], %103 {strides = array<i32>} : memref<2x128xf32, #tpu.memory_space<vmem>>, vector<2x128xf32>,
    } else {
    }
    %c0 = arith.constant 0 : index
    %c0_1 = arith.constant 0 : index
    %c0_2 = arith.constant 0 : index
    %3 = vector.load %arg2[%c0, %c0_1, %c0_2] : memref<2x8x128xbf16, #tpu.memory_space<vmem>>, vector<2x8x128xbf16>
    %4 = vector.shape_cast %3 : vector<2x8x128xbf16> to vector<16x128xbf16>
    %c0_3 = arith.constant 0 : index
    %c0_4 = arith.constant 0 : index
    %5 = vector.load %arg4[%c0_3, %c0_4] : memref<128x128xbf16, #tpu.memory_space<vmem>>, vector<128x128xbf16>
    %cst = arith.constant dense<0.000000e+00> : vector<16x128xf32>
    %6 = tpu.matmul %4, %5, %cst {dimension_numbers = #tpu.dot_dimension_numbers<[1], [0], [0], [1], [0, 0, 1, 1], [], []>} : vector<16x128xbf16>, vector<128x128xbf16>, vector<16x128xf32> -> vector<16x128xf32>
    %c0_5 = arith.constant 0 : index
    %c0_6 = arith.constant 0 : index
    %7 = vector.load %arg5[%c0_5, %c0_6] : memref<1x128xf32, #tpu.memory_space<vmem>>, vector<1x128xf32>
    %8 = vector.broadcast %7 : vector<1x128xf32> to vector<16x128xf32>
    %9 = arith.addf %6, %8 : vector<16x128xf32>
    %cst_7 = arith.constant 0.000000e+00 : f32
    %10 = vector.broadcast %cst_7 : f32 to vector<16x128xf32>
    %11 = arith.maximumf %9, %10 : vector<16x128xf32>
    %12 = arith.truncf %11 : vector<16x128xf32> to vector<16x128xbf16>
    %c0_8 = arith.constant 0 : index
    %c0_9 = arith.constant 0 : index
    %13 = vector.load %arg6[%c0_8, %c0_9] : memref<128x128xbf16, #tpu.memory_space<vmem>>, vector<128x128xbf16>
    %cst_10 = arith.constant dense<0.000000e+00> : vector<16x128xf32>
    %14 = tpu.matmul %12, %13, %cst_10 {dimension_numbers = #tpu.dot_dimension_numbers<[1], [0], [0], [1], [0, 0, 1, 1], [], []>} : vector<16x128xbf16>, vector<128x128xbf16>, vector<16x128xf32> -> vector<16x128xf32>
    %c0_11 = arith.constant 0 : index
    %c0_12 = arith.constant 0 : index
    %15 = vector.load %arg7[%c0_11, %c0_12] : memref<1x128xf32, #tpu.memory_space<vmem>>, vector<1x128xf32>
    %16 = vector.broadcast %15 : vector<1x128xf32> to vector<16x128xf32>
    %17 = arith.addf %14, %16 : vector<16x128xf32>
    %cst_13 = arith.constant 0.000000e+00 : f32
    %18 = vector.broadcast %cst_13 : f32 to vector<16x128xf32>
    %19 = arith.maximumf %17, %18 : vector<16x128xf32>
    %20 = arith.truncf %19 : vector<16x128xf32> to vector<16x128xbf16>
    %c0_14 = arith.constant 0 : index
    %c0_15 = arith.constant 0 : index
    %21 = vector.load %arg8[%c0_14, %c0_15] : memref<128x128xbf16, #tpu.memory_space<vmem>>, vector<128x128xbf16>
    %cst_16 = arith.constant dense<0.000000e+00> : vector<16x128xf32>
    %22 = tpu.matmul %20, %21, %cst_16 {dimension_numbers = #tpu.dot_dimension_numbers<[1], [0], [0], [1], [0, 0, 1, 1], [], []>} : vector<16x128xbf16>, vector<128x128xbf16>, vector<16x128xf32> -> vector<16x128xf32>
    %c0_17 = arith.constant 0 : index
    %c0_18 = arith.constant 0 : index
    %23 = vector.load %arg9[%c0_17, %c0_18] : memref<1x128xf32, #tpu.memory_space<vmem>>, vector<1x128xf32>
    %24 = vector.broadcast %23 : vector<1x128xf32> to vector<16x128xf32>
    %25 = arith.addf %22, %24 : vector<16x128xf32>
    %26 = arith.truncf %25 : vector<16x128xf32> to vector<16x128xbf16>
    %c0_19 = arith.constant 0 : index
    %c0_20 = arith.constant 0 : index
    %27 = vector.load %arg10[%c0_19, %c0_20] : memref<128x128xbf16, #tpu.memory_space<vmem>>, vector<128x128xbf16>
    %cst_21 = arith.constant dense<0.000000e+00> : vector<16x128xf32>
    %28 = tpu.matmul %26, %27, %cst_21 {dimension_numbers = #tpu.dot_dimension_numbers<[1], [0], [0], [1], [0, 0, 1, 1], [], []>} : vector<16x128xbf16>, vector<128x128xbf16>, vector<16x128xf32> -> vector<16x128xf32>
    %c0_22 = arith.constant 0 : index
    %c0_23 = arith.constant 0 : index
    %29 = vector.load %arg11[%c0_22, %c0_23] : memref<1x128xf32, #tpu.memory_space<vmem>>, vector<1x128xf32>
    %30 = vector.broadcast %29 : vector<1x128xf32> to vector<16x128xf32>
    %31 = arith.addf %28, %30 : vector<16x128xf32>
    %32 = math.tanh %31 : vector<16x128xf32>
    %c0_24 = arith.constant 0 : index
    %c0_25 = arith.constant 0 : index
    %33 = vector.load %arg12[%c0_24, %c0_25] : memref<1x128xf32, #tpu.memory_space<vmem>>, vector<1x128xf32>
    %34 = vector.broadcast %33 : vector<1x128xf32> to vector<16x128xf32>
    %35 = arith.mulf %32, %34 : vector<16x128xf32>
    %cst_26 = arith.constant dense<0.000000e+00> : vector<16xf32>
    %36 = vector.multi_reduction <add>, %35, %cst_26 [1] : vector<16x128xf32> to vector<16xf32>
    %37 = vector.shape_cast %36 : vector<16xf32> to vector<16x1xf32>
    %38 = tpu.iota {dimensions = array<i32: 0>} : vector<8x1xi32>
    %c8_i32 = arith.constant 8 : i32
    %39 = arith.muli %arg1, %c8_i32 : i32
    %40 = vector.broadcast %39 : i32 to vector<8x1xi32>
    %41 = arith.addi %38, %40 : vector<8x1xi32>
    %c8_i32_27 = arith.constant 8 : i32
    %42 = vector.broadcast %c8_i32_27 : i32 to vector<8x1xi32>
    %43 = arith.cmpi slt, %41, %42 : vector<8x1xi32>
    %44 = vector.extract_strided_slice %37 {offsets = [0, 0], sizes = [8, 1], strides = [1, 1]} : vector<16x1xf32> to vector<8x1xf32>
    %cst_28 = arith.constant -1.000000e+30 : f32
    %45 = vector.broadcast %cst_28 : f32 to vector<8x1xf32>
    %46 = arith.select %43, %44, %45 : vector<8x1xi1>, vector<8x1xf32>
    %cst_29 = arith.constant dense<0xFF800000> : vector<1xf32>
    %47 = vector.multi_reduction <maximumf>, %46, %cst_29 [0] : vector<8x1xf32> to vector<1xf32>
    %48 = vector.shape_cast %47 : vector<1xf32> to vector<1x1xf32>
    %49 = vector.extract_strided_slice %37 {offsets = [8, 0], sizes = [8, 1], strides = [1, 1]} : vector<16x1xf32> to vector<8x1xf32>
    %cst_30 = arith.constant -1.000000e+30 : f32
    %50 = vector.broadcast %cst_30 : f32 to vector<8x1xf32>
    %51 = arith.select %43, %49, %50 : vector<8x1xi1>, vector<8x1xf32>
    %cst_31 = arith.constant dense<0xFF800000> : vector<1xf32>
    %52 = vector.multi_reduction <maximumf>, %51, %cst_31 [0] : vector<8x1xf32> to vector<1xf32>
    %53 = vector.shape_cast %52 : vector<1xf32> to vector<1x1xf32>
    %54 = tpu.concatenate %48, %53 in 0 : vector<1x1xf32>, vector<1x1xf32> -> vector<2x1xf32>
    %c0_32 = arith.constant 0 : index
    %c0_33 = arith.constant 0 : index
    %55 = vector.load %arg16[%c0_32, %c0_33] : memref<2x1xf32, #tpu.memory_space<vmem>>, vector<2x1xf32>
    %56 = arith.maximumf %55, %54 : vector<2x1xf32>
    %c0_34 = arith.constant 0 : index
    %c0_35 = arith.constant 0 : index
    %57 = vector.load %arg16[%c0_34, %c0_35] : memref<2x1xf32, #tpu.memory_space<vmem>>, vector<2x1xf32>
    %58 = arith.subf %57, %56 : vector<2x1xf32>
    %59 = math.exp %58 : vector<2x1xf32>
    %60 = vector.extract_strided_slice %37 {offsets = [0, 0], sizes = [8, 1], strides = [1, 1]} : vector<16x1xf32> to vector<8x1xf32>
    %61 = vector.extract_strided_slice %56 {offsets = [0, 0], sizes = [1, 1], strides = [1, 1]} : vector<2x1xf32> to vector<1x1xf32>
    %62 = vector.broadcast %61 : vector<1x1xf32> to vector<8x1xf32>
    %63 = arith.subf %60, %62 : vector<8x1xf32>
    %64 = math.exp %63 : vector<8x1xf32>
    %cst_36 = arith.constant 0.000000e+00 : f32
    %65 = vector.broadcast %cst_36 : f32 to vector<8x1xf32>
    %66 = arith.select %43, %64, %65 : vector<8x1xi1>, vector<8x1xf32>
    %67 = vector.extract_strided_slice %37 {offsets = [8, 0], sizes = [8, 1], strides = [1, 1]} : vector<16x1xf32> to vector<8x1xf32>
    %68 = vector.extract_strided_slice %56 {offsets = [1, 0], sizes = [1, 1], strides = [1, 1]} : vector<2x1xf32> to vector<1x1xf32>
    %69 = vector.broadcast %68 : vector<1x1xf32> to vector<8x1xf32>
    %70 = arith.subf %67, %69 : vector<8x1xf32>
    %71 = math.exp %70 : vector<8x1xf32>
    %cst_37 = arith.constant 0.000000e+00 : f32
    %72 = vector.broadcast %cst_37 : f32 to vector<8x1xf32>
    %73 = arith.select %43, %71, %72 : vector<8x1xi1>, vector<8x1xf32>
    %74 = tpu.concatenate %66, %73 in 0 : vector<8x1xf32>, vector<8x1xf32> -> vector<16x1xf32>
    %75 = vector.broadcast %74 : vector<16x1xf32> to vector<16x128xf32>
    %76 = arith.mulf %75, %25 : vector<16x128xf32>
    %77 = arith.truncf %76 : vector<16x128xf32> to vector<16x128xbf16>
    %78 = vector.shape_cast %74 : vector<16x1xf32> to vector<16x1xf32>
    %79 = vector.broadcast %78 : vector<16x1xf32> to vector<16x128xf32>
    %80 = arith.truncf %79 : vector<16x128xf32> to vector<16x128xbf16>
    %81 = tpu.concatenate %77, %80 in 1 : vector<16x128xbf16>, vector<16x128xbf16> -> vector<16x256xbf16>
    %c0_38 = arith.constant 0 : index
    %c0_39 = arith.constant 0 : index
    %82 = vector.load %arg3[%c0_38, %c0_39] : memref<2x16xbf16, #tpu.memory_space<vmem>>, vector<2x16xbf16>
    %cst_40 = arith.constant dense<0.000000e+00> : vector<2x256xf32>
    %83 = tpu.matmul %82, %81, %cst_40 {dimension_numbers = #tpu.dot_dimension_numbers<[1], [0], [0], [1], [0, 0, 1, 1], [], []>} : vector<2x16xbf16>, vector<16x256xbf16>, vector<2x256xf32> -> vector<2x256xf32>
    %c0_41 = arith.constant 0 : index
    %c0_42 = arith.constant 0 : index
    %84 = vector.load %arg18[%c0_41, %c0_42] : memref<2x128xf32, #tpu.memory_space<vmem>>, vector<2x128xf32>
    %85 = vector.broadcast %59 : vector<2x1xf32> to vector<2x128xf32>
    %86 = arith.mulf %84, %85 : vector<2x128xf32>
    %87 = vector.extract_strided_slice %83 {offsets = [0, 0], sizes = [2, 128], strides = [1, 1]} : vector<2x256xf32> to vector<2x128xf32>
    %88 = arith.addf %86, %87 : vector<2x128xf32>
    %c0_43 = arith.constant 0 : index
    %c0_44 = arith.constant 0 : index
    %89 = vector.load %arg18[%c0_43, %c0_44] : memref<2x128xf32, #tpu.memory_space<vmem>>, vector<2x128xf32>
    tpu.vector_store %arg18[%c0_43, %c0_44], %88 {strides = array<i32>} : memref<2x128xf32, #tpu.memory_space<vmem>>, vector<2x128xf32>,
    %c0_45 = arith.constant 0 : index
    %c0_46 = arith.constant 0 : index
    %90 = vector.load %arg17[%c0_45, %c0_46] : memref<2x1xf32, #tpu.memory_space<vmem>>, vector<2x1xf32>
    %91 = arith.mulf %90, %59 : vector<2x1xf32>
    %92 = vector.extract_strided_slice %83 {offsets = [0, 128], sizes = [2, 1], strides = [1, 1]} : vector<2x256xf32> to vector<2x1xf32>
    %93 = arith.addf %91, %92 : vector<2x1xf32>
    %c0_47 = arith.constant 0 : index
    %c0_48 = arith.constant 0 : index
    %94 = vector.load %arg17[%c0_47, %c0_48] : memref<2x1xf32, #tpu.memory_space<vmem>>, vector<2x1xf32>
    tpu.vector_store %arg17[%c0_47, %c0_48], %93 {strides = array<i32>} : memref<2x1xf32, #tpu.memory_space<vmem>>, vector<2x1xf32>,
    %c0_49 = arith.constant 0 : index
    %c0_50 = arith.constant 0 : index
    %95 = vector.load %arg16[%c0_49, %c0_50] : memref<2x1xf32, #tpu.memory_space<vmem>>, vector<2x1xf32>
    tpu.vector_store %arg16[%c0_49, %c0_50], %56 {strides = array<i32>} : memref<2x1xf32, #tpu.memory_space<vmem>>, vector<2x1xf32>,
    %c0_i32_51 = arith.constant 0 : i32
    %96 = arith.cmpi eq, %arg1, %c0_i32_51 : i32
    %97 = arith.extui %96 : i1 to i32
    %c0_i32_52 = arith.constant 0 : i32
    %98 = arith.cmpi ne, %97, %c0_i32_52 : i32
    scf.if %98 {
      %c0_53 = arith.constant 0 : index
      %c0_54 = arith.constant 0 : index
      %99 = vector.load %arg18[%c0_53, %c0_54] : memref<2x128xf32, #tpu.memory_space<vmem>>, vector<2x128xf32>
      %c0_55 = arith.constant 0 : index
      %c0_56 = arith.constant 0 : index
      %100 = vector.load %arg17[%c0_55, %c0_56] : memref<2x1xf32, #tpu.memory_space<vmem>>, vector<2x1xf32>
      %101 = vector.broadcast %100 : vector<2x1xf32> to vector<2x128xf32>
      %102 = arith.divf %99, %101 : vector<2x128xf32>
      %103 = arith.truncf %102 : vector<2x128xf32> to vector<2x128xbf16>
      %c0_57 = arith.constant 0 : index
      %c0_58 = arith.constant 0 : index
      %104 = vector.load %arg13[%c0_57, %c0_58] : memref<128x128xbf16, #tpu.memory_space<vmem>>, vector<128x128xbf16>
      %cst_59 = arith.constant dense<0.000000e+00> : vector<2x128xf32>
      %105 = tpu.matmul %103, %104, %cst_59 {dimension_numbers = #tpu.dot_dimension_numbers<[1], [0], [0], [1], [0, 0, 1, 1], [], []>} : vector<2x128xbf16>, vector<128x128xbf16>, vector<2x128xf32> -> vector<2x128xf32>
      %c0_60 = arith.constant 0 : index
      %c0_61 = arith.constant 0 : index
      %106 = vector.load %arg14[%c0_60, %c0_61] : memref<1x128xf32, #tpu.memory_space<vmem>>, vector<1x128xf32>
      %107 = vector.broadcast %106 : vector<1x128xf32> to vector<2x128xf32>
      %108 = arith.addf %105, %107 : vector<2x128xf32>
      %c0_62 = arith.constant 0 : index
      %c0_63 = arith.constant 0 : index
      %109 = vector.load %arg15[%c0_62, %c0_63] : memref<2x128xf32, #tpu.memory_space<vmem>>, vector<2x128xf32>
      tpu.vector_store %arg15[%c0_62, %c0_63], %108 {strides = array<i32>} : memref<2x128xf32, #tpu.memory_space<vmem>>, vector<2x128xf32>,
    } else {
    }
    return
  }
  func.func @transform_0(%arg0: i32, %arg1: i32) -> (i32, i32, i32) {
    %c0_i32 = arith.constant 0 : i32
    %c0_i32_0 = arith.constant 0 : i32
    return %arg0, %arg1, %c0_i32 : i32, i32, i32
  }
  func.func @transform_1(%arg0: i32, %arg1: i32) -> (i32, i32) {
    %c0_i32 = arith.constant 0 : i32
    %c0_i32_0 = arith.constant 0 : i32
    %c0_i32_1 = arith.constant 0 : i32
    return %c0_i32, %c0_i32_0 : i32, i32
  }
  func.func @transform_2(%arg0: i32, %arg1: i32) -> (i32, i32) {
    %c0_i32 = arith.constant 0 : i32
    %c0_i32_0 = arith.constant 0 : i32
    %c0_i32_1 = arith.constant 0 : i32
    return %c0_i32, %c0_i32_0 : i32, i32
  }
  func.func @transform_3(%arg0: i32, %arg1: i32) -> (i32, i32) {
    %c0_i32 = arith.constant 0 : i32
    %c0_i32_0 = arith.constant 0 : i32
    %c0_i32_1 = arith.constant 0 : i32
    return %c0_i32, %c0_i32_0 : i32, i32
  }
  func.func @transform_4(%arg0: i32, %arg1: i32) -> (i32, i32) {
    %c0_i32 = arith.constant 0 : i32
    %c0_i32_0 = arith.constant 0 : i32
    %c0_i32_1 = arith.constant 0 : i32
    return %c0_i32, %c0_i32_0 : i32, i32
  }
  func.func @transform_5(%arg0: i32, %arg1: i32) -> (i32, i32) {
    %c0_i32 = arith.constant 0 : i32
    %c0_i32_0 = arith.constant 0 : i32
    %c0_i32_1 = arith.constant 0 : i32
    return %c0_i32, %c0_i32_0 : i32, i32
  }
  func.func @transform_6(%arg0: i32, %arg1: i32) -> (i32, i32) {
    %c0_i32 = arith.constant 0 : i32
    %c0_i32_0 = arith.constant 0 : i32
    %c0_i32_1 = arith.constant 0 : i32
    return %c0_i32, %c0_i32_0 : i32, i32
  }
  func.func @transform_7(%arg0: i32, %arg1: i32) -> (i32, i32) {
    %c0_i32 = arith.constant 0 : i32
    %c0_i32_0 = arith.constant 0 : i32
    %c0_i32_1 = arith.constant 0 : i32
    return %c0_i32, %c0_i32_0 : i32, i32
  }
  func.func @transform_8(%arg0: i32, %arg1: i32) -> (i32, i32) {
    %c0_i32 = arith.constant 0 : i32
    %c0_i32_0 = arith.constant 0 : i32
    %c0_i32_1 = arith.constant 0 : i32
    return %c0_i32, %c0_i32_0 : i32, i32
  }
  func.func @transform_9(%arg0: i32, %arg1: i32) -> (i32, i32) {
    %c0_i32 = arith.constant 0 : i32
    %c0_i32_0 = arith.constant 0 : i32
    %c0_i32_1 = arith.constant 0 : i32
    return %c0_i32, %c0_i32_0 : i32, i32
  }
  func.func @transform_10(%arg0: i32, %arg1: i32) -> (i32, i32) {
    %c0_i32 = arith.constant 0 : i32
    %c0_i32_0 = arith.constant 0 : i32
    %c0_i32_1 = arith.constant 0 : i32
    return %c0_i32, %c0_i32_0 : i32, i32
  }
  func.func @transform_11(%arg0: i32, %arg1: i32) -> (i32, i32) {
    %c0_i32 = arith.constant 0 : i32
    %c0_i32_0 = arith.constant 0 : i32
    %c0_i32_1 = arith.constant 0 : i32
    return %c0_i32, %c0_i32_0 : i32, i32
  }
  func.func @transform_12(%arg0: i32, %arg1: i32) -> (i32, i32) {
    %c0_i32 = arith.constant 0 : i32
    %c0_i32_0 = arith.constant 0 : i32
    %c0_i32_1 = arith.constant 0 : i32
    return %c0_i32, %c0_i32_0 : i32, i32
  }
  func.func @transform_13(%arg0: i32, %arg1: i32) -> (i32, i32) {
    %c0_i32 = arith.constant 0 : i32
    %c0_i32_0 = arith.constant 0 : i32
    return %arg0, %c0_i32 : i32, i32
  }
}

</mosaic_0001>

<llo_original>
// kernel: tpu_custom_call.1
$region0: #{tpu_custom_call.1}
  #allocation0 [shape = 'u32[]', space=smem, size = 0x4, offset = 0x4, fixed_abs, tag = 'smem constant byte address 0x4 - core index']
  #allocation1 [shape = 'u32[144,128]{1,0:T(1,128)}', space=vmem, size = 0x12000, scoped, tag = 'internal scratch']
  #allocation2 [shape = 'f32[2,1]{1,0:T(2,128)}', space=vmem, size = 0x400, scoped, tag = 'scratch operand']
  #allocation3 [shape = 'f32[2,1]{1,0:T(2,128)}', space=vmem, size = 0x400, scoped, tag = 'scratch operand']
  #allocation4 [shape = 'f32[2,128]{1,0:T(2,128)}', space=vmem, size = 0x400, scoped, tag = 'scratch operand']
  %s0 = inlined_call_operand.hbm [shape: bf16[2,8,128], index: 0, kind: input, shape index: {}]
  %s1 = inlined_call_operand.vmem [shape: bf16[2,16], index: 1, kind: input, shape index: {}]
  %s2 = inlined_call_operand.hbm [shape: bf16[128,128], index: 2, kind: input, shape index: {}]
  %s3 = inlined_call_operand.vmem [shape: f32[1,128], index: 3, kind: input, shape index: {}]
  %s4 = inlined_call_operand.hbm [shape: bf16[128,128], index: 4, kind: input, shape index: {}]
  %s5 = inlined_call_operand.vmem [shape: f32[1,128], index: 5, kind: input, shape index: {}]
  %s6 = inlined_call_operand.hbm [shape: bf16[128,128], index: 6, kind: input, shape index: {}]
  %s7 = inlined_call_operand.vmem [shape: f32[1,128], index: 7, kind: input, shape index: {}]
  %s8 = inlined_call_operand.hbm [shape: bf16[128,128], index: 8, kind: input, shape index: {}]
  %s9 = inlined_call_operand.vmem [shape: f32[1,128], index: 9, kind: input, shape index: {}]
  %s10 = inlined_call_operand.vmem [shape: f32[1,128], index: 10, kind: input, shape index: {}]
  %s11 = inlined_call_operand.hbm [shape: bf16[128,128], index: 11, kind: input, shape index: {}]
  %s12 = inlined_call_operand.vmem [shape: f32[1,128], index: 12, kind: input, shape index: {}]
  %s13 = inlined_call_operand.hbm [shape: f32[2,128], index: 13, kind: output, shape index: {}]
  %s14 = sld [smem:[#allocation0]]
  $region94: #{tpu_custom_call.1} parent=0
    _
  %s16 = ssub.s32 1, %s14
  %s17 = scalar_select 0, %s16, %s14
  $region1: #{tpu_custom_call.1} parent=0
    #allocation5 [shape = 'u8[4096]{0}', space=vmem, size = 0x1000, scoped, tag = 'input window, operand 0, single buffered']
    #allocation6 [shape = 's32[1]{0}', space=sflag, size = 0x4, scoped, tag = 'scoped memory for tpu_custom_call.1']
    #allocation7 [shape = 's32[1]{0}', space=sflag, size = 0x4, scoped, tag = 'scoped memory for tpu_custom_call.1']
    #allocation8 [shape = 'u8[32768]{0}', space=vmem, size = 0x8000, scoped, tag = 'input window, operand 2, single buffered']
    #allocation9 [shape = 's32[1]{0}', space=sflag, size = 0x4, scoped, tag = 'scoped memory for tpu_custom_call.1']
    #allocation10 [shape = 'u8[32768]{0}', space=vmem, size = 0x8000, scoped, tag = 'input window, operand 4, single buffered']
    #allocation11 [shape = 'u8[32768]{0}', space=vmem, size = 0x8000, scoped, tag = 'input window, operand 6, single buffered']
    #allocation12 [shape = 's32[1]{0}', space=sflag, size = 0x4, scoped, tag = 'scoped memory for tpu_custom_call.1']
    #allocation13 [shape = 'u8[32768]{0}', space=vmem, size = 0x8000, scoped, tag = 'input window, operand 8, single buffered']
    #allocation14 [shape = 'u8[32768]{0}', space=vmem, size = 0x8000, scoped, tag = 'input window, operand 11, single buffered']
    #allocation15 [shape = 's32[1]{0}', space=sflag, size = 0x4, scoped, tag = 'scoped memory for tpu_custom_call.1']
    #allocation16 [shape = 'u8[1024]{0}', space=vmem, size = 0x400, scoped, tag = 'output window, operand 0, single buffered']
    %18 = vsyncpa [#allocation6], 0
    %19 = vsyncpa [#allocation9], 0
    %20 = vsyncpa [#allocation12], 0
    %21 = vsyncpa [#allocation15], 0
    %22 = vsyncpa [#allocation7], 0
    // Predicated region
    $region2: #{tpu_custom_call.1} parent=1 // pred_check
      _
    $region3: #{tpu_custom_call.1} parent=1 // pred_check_branch
      %24 = sbr.rel (0) target = $region5
    $region4: #{tpu_custom_call.1} parent=1 // pred_region
      %s26 = ssub.s32 128, 128
      %27 = vsyncadd [#allocation6], %s26
      %s28 = sshll.u32 [#allocation5], 4
      %s29 = int_to_ptr.vmem [resolvable:$true] %s28
      %34 = dma.hbm_to_vmem [thread:$0]  %s0, 128, %s29, [#allocation6], 64, 64, 4
    $region5: #{tpu_custom_call.1} parent=1 // pred_fallthru
      _
    // Predicated region
    $region6: #{tpu_custom_call.1} parent=1 // pred_check
      _
    $region7: #{tpu_custom_call.1} parent=1 // pred_check_branch
      %36 = sbr.rel (0) target = $region9
    $region8: #{tpu_custom_call.1} parent=1 // pred_region
      _
    $region9: #{tpu_custom_call.1} parent=1 // pred_fallthru
      _
    // Predicated region
    $region10: #{tpu_custom_call.1} parent=1 // pred_check
      _
    $region11: #{tpu_custom_call.1} parent=1 // pred_check_branch
      %38 = sbr.rel (0) target = $region13
    $region12: #{tpu_custom_call.1} parent=1 // pred_region
      %s40 = ssub.s32 1024, 1024
      %41 = vsyncadd [#allocation9], %s40
      %s42 = sshll.u32 [#allocation8], 4
      %s43 = int_to_ptr.vmem [resolvable:$true] %s42
      %48 = dma.hbm_to_vmem [thread:$0]  %s2, 1024, %s43, [#allocation9], 64, 64, 4
    $region13: #{tpu_custom_call.1} parent=1 // pred_fallthru
      _
    // Predicated region
    $region14: #{tpu_custom_call.1} parent=1 // pred_check
      _
    $region15: #{tpu_custom_call.1} parent=1 // pred_check_branch
      %50 = sbr.rel (0) target = $region17
    $region16: #{tpu_custom_call.1} parent=1 // pred_region
      _
    $region17: #{tpu_custom_call.1} parent=1 // pred_fallthru
      _
    // Predicated region
    $region18: #{tpu_custom_call.1} parent=1 // pred_check
      _
    $region19: #{tpu_custom_call.1} parent=1 // pred_check_branch
      %52 = sbr.rel (0) target = $region21
    $region20: #{tpu_custom_call.1} parent=1 // pred_region
      %s54 = ssub.s32 1024, 1024
      %55 = vsyncadd [#allocation9], %s54
      %s56 = sshll.u32 [#allocation10], 4
      %s57 = int_to_ptr.vmem [resolvable:$true] %s56
      %62 = dma.hbm_to_vmem [thread:$0]  %s4, 1024, %s57, [#allocation9], 64, 64, 4
    $region21: #{tpu_custom_call.1} parent=1 // pred_fallthru
      _
    // Predicated region
    $region22: #{tpu_custom_call.1} parent=1 // pred_check
      _
    $region23: #{tpu_custom_call.1} parent=1 // pred_check_branch
      %64 = sbr.rel (0) target = $region25
    $region24: #{tpu_custom_call.1} parent=1 // pred_region
      _
    $region25: #{tpu_custom_call.1} parent=1 // pred_fallthru
      _
    // Predicated region
    $region26: #{tpu_custom_call.1} parent=1 // pred_check
      _
    $region27: #{tpu_custom_call.1} parent=1 // pred_check_branch
      %66 = sbr.rel (0) target = $region29
    $region28: #{tpu_custom_call.1} parent=1 // pred_region
      %s68 = ssub.s32 1024, 1024
      %69 = vsyncadd [#allocation12], %s68
      %s70 = sshll.u32 [#allocation11], 4
      %s71 = int_to_ptr.vmem [resolvable:$true] %s70
      %76 = dma.hbm_to_vmem [thread:$0]  %s6, 1024, %s71, [#allocation12], 64, 64, 4
    $region29: #{tpu_custom_call.1} parent=1 // pred_fallthru
      _
    // Predicated region
    $region30: #{tpu_custom_call.1} parent=1 // pred_check
      _
    $region31: #{tpu_custom_call.1} parent=1 // pred_check_branch
      %78 = sbr.rel (0) target = $region33
    $region32: #{tpu_custom_call.1} parent=1 // pred_region
      _
    $region33: #{tpu_custom_call.1} parent=1 // pred_fallthru
      _
    // Predicated region
    $region34: #{tpu_custom_call.1} parent=1 // pred_check
      _
    $region35: #{tpu_custom_call.1} parent=1 // pred_check_branch
      %80 = sbr.rel (0) target = $region37
    $region36: #{tpu_custom_call.1} parent=1 // pred_region
      %s82 = ssub.s32 1024, 1024
      %83 = vsyncadd [#allocation12], %s82
      %s84 = sshll.u32 [#allocation13], 4
      %s85 = int_to_ptr.vmem [resolvable:$true] %s84
      %90 = dma.hbm_to_vmem [thread:$0]  %s8, 1024, %s85, [#allocation12], 64, 64, 4
    $region37: #{tpu_custom_call.1} parent=1 // pred_fallthru
      _
    // Predicated region
    $region38: #{tpu_custom_call.1} parent=1 // pred_check
      _
    $region39: #{tpu_custom_call.1} parent=1 // pred_check_branch
      %92 = sbr.rel (0) target = $region41
    $region40: #{tpu_custom_call.1} parent=1 // pred_region
      _
    $region41: #{tpu_custom_call.1} parent=1 // pred_fallthru
      _
    // Predicated region
    $region42: #{tpu_custom_call.1} parent=1 // pred_check
      _
    $region43: #{tpu_custom_call.1} parent=1 // pred_check_branch
      %94 = sbr.rel (0) target = $region45
    $region44: #{tpu_custom_call.1} parent=1 // pred_region
      _
    $region45: #{tpu_custom_call.1} parent=1 // pred_fallthru
      _
    // Predicated region
    $region46: #{tpu_custom_call.1} parent=1 // pred_check
      _
    $region47: #{tpu_custom_call.1} parent=1 // pred_check_branch
      %96 = sbr.rel (0) target = $region49
    $region48: #{tpu_custom_call.1} parent=1 // pred_region
      %s98 = ssub.s32 1024, 1024
      %99 = vsyncadd [#allocation15], %s98
      %s100 = sshll.u32 [#allocation14], 4
      %s101 = int_to_ptr.vmem [resolvable:$true] %s100
      %106 = dma.hbm_to_vmem [thread:$0]  %s11, 1024, %s101, [#allocation15], 64, 64, 4
    $region49: #{tpu_custom_call.1} parent=1 // pred_fallthru
      _
    // Predicated region
    $region50: #{tpu_custom_call.1} parent=1 // pred_check
      _
    $region51: #{tpu_custom_call.1} parent=1 // pred_check_branch
      %108 = sbr.rel (0) target = $region53
    $region52: #{tpu_custom_call.1} parent=1 // pred_region
      _
    $region53: #{tpu_custom_call.1} parent=1 // pred_fallthru
      _
    // Predicated region
    $region54: #{tpu_custom_call.1} parent=1 // pred_check
      _
    $region55: #{tpu_custom_call.1} parent=1 // pred_check_branch
      %110 = sbr.rel (0) target = $region57
    $region56: #{tpu_custom_call.1} parent=1 // pred_region
      %111 = dma.done [#allocation6], 128
    $region57: #{tpu_custom_call.1} parent=1 // pred_fallthru
      _
    // Predicated region
    $region58: #{tpu_custom_call.1} parent=1 // pred_check
      _
    $region59: #{tpu_custom_call.1} parent=1 // pred_check_branch
      %113 = sbr.rel (0) target = $region61
    $region60: #{tpu_custom_call.1} parent=1 // pred_region
      %114 = dma.done [#allocation9], 1024
    $region61: #{tpu_custom_call.1} parent=1 // pred_fallthru
      _
    // Predicated region
    $region62: #{tpu_custom_call.1} parent=1 // pred_check
      _
    $region63: #{tpu_custom_call.1} parent=1 // pred_check_branch
      %116 = sbr.rel (0) target = $region65
    $region64: #{tpu_custom_call.1} parent=1 // pred_region
      %117 = dma.done [#allocation9], 1024
    $region65: #{tpu_custom_call.1} parent=1 // pred_fallthru
      _
    // Predicated region
    $region66: #{tpu_custom_call.1} parent=1 // pred_check
      _
    $region67: #{tpu_custom_call.1} parent=1 // pred_check_branch
      %119 = sbr.rel (0) target = $region69
    $region68: #{tpu_custom_call.1} parent=1 // pred_region
      %120 = dma.done [#allocation12], 1024
    $region69: #{tpu_custom_call.1} parent=1 // pred_fallthru
      _
    // Predicated region
    $region70: #{tpu_custom_call.1} parent=1 // pred_check
      _
    $region71: #{tpu_custom_call.1} parent=1 // pred_check_branch
      %122 = sbr.rel (0) target = $region73
    $region72: #{tpu_custom_call.1} parent=1 // pred_region
      %123 = dma.done [#allocation12], 1024
    $region73: #{tpu_custom_call.1} parent=1 // pred_fallthru
      _
    // Predicated region
    $region74: #{tpu_custom_call.1} parent=1 // pred_check
      _
    $region75: #{tpu_custom_call.1} parent=1 // pred_check_branch
      %125 = sbr.rel (0) target = $region77
    $region76: #{tpu_custom_call.1} parent=1 // pred_region
      %126 = dma.done [#allocation15], 1024
    $region77: #{tpu_custom_call.1} parent=1 // pred_fallthru
      _
    %p128 = scmp.eq.s32.totalorder 0, 0
    // Predicated region
    $region78: #{tpu_custom_call.1} parent=1 // pred_check
      %p129 = pneg %p128
    $region79: #{tpu_custom_call.1} parent=1 // pred_check_branch
      %131 = sbr.rel (%p129) target = $region81
    $region80: #{tpu_custom_call.1} parent=1 // pred_region
      %vm132 = vcmask 1024
      %133 = vst.msk [vmem:[#allocation2] sm:$0x3] %vm132, -1e+30
      %134 = vst.msk [vmem:[#allocation3] sm:$0x3] %vm132, 0.0
      %135 = vst [vmem:[#allocation4] sm:$0x3] 0.0
    $region81: #{tpu_custom_call.1} parent=1 // pred_fallthru
      _
    %v136 = vld [vmem:[#allocation5] sm:$0xf]
    %v137 = vld [vmem:[#allocation5 + $0x4] sm:$0xf]
    %v138 = vld [vmem:[#allocation8] sm:$0xf]
    %v139 = vld [vmem:[#allocation8 + $0x4] sm:$0xf]
    %v140 = vld [vmem:[#allocation8 + $0x8] sm:$0xf]
    %v141 = vld [vmem:[#allocation8 + $0xc] sm:$0xf]
    %v142 = vld [vmem:[#allocation8 + $0x10] sm:$0xf]
    %v143 = vld [vmem:[#allocation8 + $0x14] sm:$0xf]
    %v144 = vld [vmem:[#allocation8 + $0x18] sm:$0xf]
    %v145 = vld [vmem:[#allocation8 + $0x1c] sm:$0xf]
    %v146 = vld [vmem:[#allocation8 + $0x20] sm:$0xf]
    %v147 = vld [vmem:[#allocation8 + $0x24] sm:$0xf]
    %v148 = vld [vmem:[#allocation8 + $0x28] sm:$0xf]
    %v149 = vld [vmem:[#allocation8 + $0x2c] sm:$0xf]
    %v150 = vld [vmem:[#allocation8 + $0x30] sm:$0xf]
    %v151 = vld [vmem:[#allocation8 + $0x34] sm:$0xf]
    %v152 = vld [vmem:[#allocation8 + $0x38] sm:$0xf]
    %v153 = vld [vmem:[#allocation8 + $0x3c] sm:$0xf]
    %v154 = vld [vmem:[%s3] sm:$0x1]
    %v156 = vlaneseq
    %v157 = vshrl.u32 %v156, 7
    %v158 = vsub.s32 0, %v157
    %v159 = vrot.slane %v154, %v158
    %v163 = vunpack.c.l.b16 %v136
    %v164 = vunpack.c.l.b16 %v137
    %v165 = vpack.c.b16 %v164, %v163
    %v183 = vunpack.c.l.b16 %v138
    %v184 = vunpack.c.l.b16 %v139
    %v185 = vunpack.c.l.b16 %v140
    %v186 = vunpack.c.l.b16 %v141
    %v187 = vunpack.c.l.b16 %v142
    %v188 = vunpack.c.l.b16 %v143
    %v189 = vunpack.c.l.b16 %v144
    %v190 = vunpack.c.l.b16 %v145
    %v191 = vunpack.c.l.b16 %v146
    %v192 = vunpack.c.l.b16 %v147
    %v193 = vunpack.c.l.b16 %v148
    %v194 = vunpack.c.l.b16 %v149
    %v195 = vunpack.c.l.b16 %v150
    %v196 = vunpack.c.l.b16 %v151
    %v197 = vunpack.c.l.b16 %v152
    %v198 = vunpack.c.l.b16 %v153
    %v199 = vpack.c.b16 %v184, %v183
    %v200 = vpack.c.b16 %v186, %v185
    %v201 = vpack.c.b16 %v188, %v187
    %v202 = vpack.c.b16 %v190, %v189
    %v203 = vpack.c.b16 %v192, %v191
    %v204 = vpack.c.b16 %v194, %v193
    %v205 = vpack.c.b16 %v196, %v195
    %v206 = vpack.c.b16 %v198, %v197
    %215 = vmatprep.subr.bf16.mxu0 0
    %216 = vmatpush1.bf16.msra.mxu0 %v206
    %217 = vmatprep.subr.bf16.mxu0 0
    %218 = vmatpush1.bf16.msra.mxu0 %v205
    %219 = vmatprep.subr.bf16.mxu0 0
    %220 = vmatpush1.bf16.msra.mxu0 %v204
    %221 = vmatprep.subr.bf16.mxu0 0
    %222 = vmatpush1.bf16.msra.mxu0 %v203
    %223 = vmatprep.subr.bf16.mxu0 0
    %224 = vmatpush1.bf16.msra.mxu0 %v202
    %225 = vmatprep.subr.bf16.mxu0 0
    %226 = vmatpush1.bf16.msra.mxu0 %v201
    %227 = vmatprep.subr.bf16.mxu0 0
    %228 = vmatpush1.bf16.msra.mxu0 %v200
    %229 = vmatprep.subr.bf16.mxu0 0
    %230 = vmatpush1.bf16.msra.mxu0 %v199
    %231 = vmatprep.subr.bf16.mxu0 0
    %232 = vmatpush2.bf16.msra.mxu0 0
    %233 = vmatprep.subr.bf16.mxu0 0
    %234 = vmatpush2.bf16.msra.mxu0 0
    %235 = vmatprep.subr.bf16.mxu0 0
    %236 = vmatpush2.bf16.msra.mxu0 0
    %237 = vmatprep.subr.bf16.mxu0 0
    %238 = vmatpush2.bf16.msra.mxu0 0
    %239 = vmatprep.subr.bf16.mxu0 0
    %240 = vmatpush2.bf16.msra.mxu0 0
    %241 = vmatprep.subr.bf16.mxu0 0
    %242 = vmatpush2.bf16.msra.mxu0 0
    %243 = vmatprep.subr.bf16.mxu0 0
    %244 = vmatpush2.bf16.msra.mxu0 0
    %245 = vmatprep.subr.bf16.mxu0 0
    %246 = vmatpush2.bf16.msra.mxu0 0
    %247 = vmatprep.mubr.bf16.mxu0 0
    %248 = vmatmul.mubr.bf16.gmra.mxu0 %v165
    %v249 = vpop.f32.mrf.mxu0
    %v250 = vadd.f32 %v159, %v249
    %v251 = vpop.f32.mrf.mxu0
    %v252 = vpop.f32.mrf.mxu0
    %v253 = vadd.f32 %v159, %v252
    %v254 = vpop.f32.mrf.mxu0
    %255 = vdwg.mxu0
    %v256 = vmax.f32 %v250, 0.0
    %v257 = vmax.f32 %v253, 0.0
    %v258 = vpack.c.bf16 %v257, %v256
    %v259 = vld [vmem:[#allocation10] sm:$0xf]
    %v260 = vld [vmem:[#allocation10 + $0x4] sm:$0xf]
    %v261 = vld [vmem:[#allocation10 + $0x8] sm:$0xf]
    %v262 = vld [vmem:[#allocation10 + $0xc] sm:$0xf]
    %v263 = vld [vmem:[#allocation10 + $0x10] sm:$0xf]
    %v264 = vld [vmem:[#allocation10 + $0x14] sm:$0xf]
    %v265 = vld [vmem:[#allocation10 + $0x18] sm:$0xf]
    %v266 = vld [vmem:[#allocation10 + $0x1c] sm:$0xf]
    %v267 = vld [vmem:[#allocation10 + $0x20] sm:$0xf]
    %v268 = vld [vmem:[#allocation10 + $0x24] sm:$0xf]
    %v269 = vld [vmem:[#allocation10 + $0x28] sm:$0xf]
    %v270 = vld [vmem:[#allocation10 + $0x2c] sm:$0xf]
    %v271 = vld [vmem:[#allocation10 + $0x30] sm:$0xf]
    %v272 = vld [vmem:[#allocation10 + $0x34] sm:$0xf]
    %v273 = vld [vmem:[#allocation10 + $0x38] sm:$0xf]
    %v274 = vld [vmem:[#allocation10 + $0x3c] sm:$0xf]
    %v275 = vld [vmem:[%s5] sm:$0x1]
    %v277 = vlaneseq
    %v278 = vshrl.u32 %v277, 7
    %v279 = vsub.s32 0, %v278
    %v280 = vrot.slane %v275, %v279
    %v298 = vunpack.c.l.b16 %v259
    %v299 = vunpack.c.l.b16 %v260
    %v300 = vunpack.c.l.b16 %v261
    %v301 = vunpack.c.l.b16 %v262
    %v302 = vunpack.c.l.b16 %v263
    %v303 = vunpack.c.l.b16 %v264
    %v304 = vunpack.c.l.b16 %v265
    %v305 = vunpack.c.l.b16 %v266
    %v306 = vunpack.c.l.b16 %v267
    %v307 = vunpack.c.l.b16 %v268
    %v308 = vunpack.c.l.b16 %v269
    %v309 = vunpack.c.l.b16 %v270
    %v310 = vunpack.c.l.b16 %v271
    %v311 = vunpack.c.l.b16 %v272
    %v312 = vunpack.c.l.b16 %v273
    %v313 = vunpack.c.l.b16 %v274
    %v314 = vpack.c.b16 %v299, %v298
    %v315 = vpack.c.b16 %v301, %v300
    %v316 = vpack.c.b16 %v303, %v302
    %v317 = vpack.c.b16 %v305, %v304
    %v318 = vpack.c.b16 %v307, %v306
    %v319 = vpack.c.b16 %v309, %v308
    %v320 = vpack.c.b16 %v311, %v310
    %v321 = vpack.c.b16 %v313, %v312
    %330 = vmatprep.subr.bf16.mxu0 0
    %331 = vmatpush1.bf16.msra.mxu0 %v321
    %332 = vmatprep.subr.bf16.mxu0 0
    %333 = vmatpush1.bf16.msra.mxu0 %v320
    %334 = vmatprep.subr.bf16.mxu0 0
    %335 = vmatpush1.bf16.msra.mxu0 %v319
    %336 = vmatprep.subr.bf16.mxu0 0
    %337 = vmatpush1.bf16.msra.mxu0 %v318
    %338 = vmatprep.subr.bf16.mxu0 0
    %339 = vmatpush1.bf16.msra.mxu0 %v317
    %340 = vmatprep.subr.bf16.mxu0 0
    %341 = vmatpush1.bf16.msra.mxu0 %v316
    %342 = vmatprep.subr.bf16.mxu0 0
    %343 = vmatpush1.bf16.msra.mxu0 %v315
    %344 = vmatprep.subr.bf16.mxu0 0
    %345 = vmatpush1.bf16.msra.mxu0 %v314
    %346 = vmatprep.subr.bf16.mxu0 0
    %347 = vmatpush2.bf16.msra.mxu0 0
    %348 = vmatprep.subr.bf16.mxu0 0
    %349 = vmatpush2.bf16.msra.mxu0 0
    %350 = vmatprep.subr.bf16.mxu0 0
    %351 = vmatpush2.bf16.msra.mxu0 0
    %352 = vmatprep.subr.bf16.mxu0 0
    %353 = vmatpush2.bf16.msra.mxu0 0
    %354 = vmatprep.subr.bf16.mxu0 0
    %355 = vmatpush2.bf16.msra.mxu0 0
    %356 = vmatprep.subr.bf16.mxu0 0
    %357 = vmatpush2.bf16.msra.mxu0 0
    %358 = vmatprep.subr.bf16.mxu0 0
    %359 = vmatpush2.bf16.msra.mxu0 0
    %360 = vmatprep.subr.bf16.mxu0 0
    %361 = vmatpush2.bf16.msra.mxu0 0
    %362 = vmatprep.mubr.bf16.mxu0 0
    %363 = vmatmul.mubr.bf16.gmra.mxu0 %v258
    %v364 = vpop.f32.mrf.mxu0
    %v365 = vadd.f32 %v280, %v364
    %v366 = vpop.f32.mrf.mxu0
    %v367 = vpop.f32.mrf.mxu0
    %v368 = vadd.f32 %v280, %v367
    %v369 = vpop.f32.mrf.mxu0
    %370 = vdwg.mxu0
    %v371 = vmax.f32 %v365, 0.0
    %v372 = vmax.f32 %v368, 0.0
    %v373 = vpack.c.bf16 %v372, %v371
    %v374 = vld [vmem:[#allocation11] sm:$0xf]
    %v375 = vld [vmem:[#allocation11 + $0x4] sm:$0xf]
    %v376 = vld [vmem:[#allocation11 + $0x8] sm:$0xf]
    %v377 = vld [vmem:[#allocation11 + $0xc] sm:$0xf]
    %v378 = vld [vmem:[#allocation11 + $0x10] sm:$0xf]
    %v379 = vld [vmem:[#allocation11 + $0x14] sm:$0xf]
    %v380 = vld [vmem:[#allocation11 + $0x18] sm:$0xf]
    %v381 = vld [vmem:[#allocation11 + $0x1c] sm:$0xf]
    %v382 = vld [vmem:[#allocation11 + $0x20] sm:$0xf]
    %v383 = vld [vmem:[#allocation11 + $0x24] sm:$0xf]
    %v384 = vld [vmem:[#allocation11 + $0x28] sm:$0xf]
    %v385 = vld [vmem:[#allocation11 + $0x2c] sm:$0xf]
    %v386 = vld [vmem:[#allocation11 + $0x30] sm:$0xf]
    %v387 = vld [vmem:[#allocation11 + $0x34] sm:$0xf]
    %v388 = vld [vmem:[#allocation11 + $0x38] sm:$0xf]
    %v389 = vld [vmem:[#allocation11 + $0x3c] sm:$0xf]
    %v390 = vld [vmem:[%s7] sm:$0x1]
    %v392 = vlaneseq
    %v393 = vshrl.u32 %v392, 7
    %v394 = vsub.s32 0, %v393
    %v395 = vrot.slane %v390, %v394
    %v413 = vunpack.c.l.b16 %v374
    %v414 = vunpack.c.l.b16 %v375
    %v415 = vunpack.c.l.b16 %v376
    %v416 = vunpack.c.l.b16 %v377
    %v417 = vunpack.c.l.b16 %v378
    %v418 = vunpack.c.l.b16 %v379
    %v419 = vunpack.c.l.b16 %v380
    %v420 = vunpack.c.l.b16 %v381
    %v421 = vunpack.c.l.b16 %v382
    %v422 = vunpack.c.l.b16 %v383
    %v423 = vunpack.c.l.b16 %v384
    %v424 = vunpack.c.l.b16 %v385
    %v425 = vunpack.c.l.b16 %v386
    %v426 = vunpack.c.l.b16 %v387
    %v427 = vunpack.c.l.b16 %v388
    %v428 = vunpack.c.l.b16 %v389
    %v429 = vpack.c.b16 %v414, %v413
    %v430 = vpack.c.b16 %v416, %v415
    %v431 = vpack.c.b16 %v418, %v417
    %v432 = vpack.c.b16 %v420, %v419
    %v433 = vpack.c.b16 %v422, %v421
    %v434 = vpack.c.b16 %v424, %v423
    %v435 = vpack.c.b16 %v426, %v425
    %v436 = vpack.c.b16 %v428, %v427
    %445 = vmatprep.subr.bf16.mxu0 0
    %446 = vmatpush1.bf16.msra.mxu0 %v436
    %447 = vmatprep.subr.bf16.mxu0 0
    %448 = vmatpush1.bf16.msra.mxu0 %v435
    %449 = vmatprep.subr.bf16.mxu0 0
    %450 = vmatpush1.bf16.msra.mxu0 %v434
    %451 = vmatprep.subr.bf16.mxu0 0
    %452 = vmatpush1.bf16.msra.mxu0 %v433
    %453 = vmatprep.subr.bf16.mxu0 0
    %454 = vmatpush1.bf16.msra.mxu0 %v432
    %455 = vmatprep.subr.bf16.mxu0 0
    %456 = vmatpush1.bf16.msra.mxu0 %v431
    %457 = vmatprep.subr.bf16.mxu0 0
    %458 = vmatpush1.bf16.msra.mxu0 %v430
    %459 = vmatprep.subr.bf16.mxu0 0
    %460 = vmatpush1.bf16.msra.mxu0 %v429
    %461 = vmatprep.subr.bf16.mxu0 0
    %462 = vmatpush2.bf16.msra.mxu0 0
    %463 = vmatprep.subr.bf16.mxu0 0
    %464 = vmatpush2.bf16.msra.mxu0 0
    %465 = vmatprep.subr.bf16.mxu0 0
    %466 = vmatpush2.bf16.msra.mxu0 0
    %467 = vmatprep.subr.bf16.mxu0 0
    %468 = vmatpush2.bf16.msra.mxu0 0
    %469 = vmatprep.subr.bf16.mxu0 0
    %470 = vmatpush2.bf16.msra.mxu0 0
    %471 = vmatprep.subr.bf16.mxu0 0
    %472 = vmatpush2.bf16.msra.mxu0 0
    %473 = vmatprep.subr.bf16.mxu0 0
    %474 = vmatpush2.bf16.msra.mxu0 0
    %475 = vmatprep.subr.bf16.mxu0 0
    %476 = vmatpush2.bf16.msra.mxu0 0
    %477 = vmatprep.mubr.bf16.mxu0 0
    %478 = vmatmul.mubr.bf16.gmra.mxu0 %v373
    %v479 = vpop.f32.mrf.mxu0
    %v480 = vadd.f32 %v395, %v479
    %v481 = vpop.f32.mrf.mxu0
    %v482 = vpop.f32.mrf.mxu0
    %v483 = vadd.f32 %v395, %v482
    %v484 = vpop.f32.mrf.mxu0
    %485 = vdwg.mxu0
    %v486 = vpack.c.bf16 %v483, %v480
    %v487 = vld [vmem:[#allocation13] sm:$0xf]
    %v488 = vld [vmem:[#allocation13 + $0x4] sm:$0xf]
    %v489 = vld [vmem:[#allocation13 + $0x8] sm:$0xf]
    %v490 = vld [vmem:[#allocation13 + $0xc] sm:$0xf]
    %v491 = vld [vmem:[#allocation13 + $0x10] sm:$0xf]
    %v492 = vld [vmem:[#allocation13 + $0x14] sm:$0xf]
    %v493 = vld [vmem:[#allocation13 + $0x18] sm:$0xf]
    %v494 = vld [vmem:[#allocation13 + $0x1c] sm:$0xf]
    %v495 = vld [vmem:[#allocation13 + $0x20] sm:$0xf]
    %v496 = vld [vmem:[#allocation13 + $0x24] sm:$0xf]
    %v497 = vld [vmem:[#allocation13 + $0x28] sm:$0xf]
    %v498 = vld [vmem:[#allocation13 + $0x2c] sm:$0xf]
    %v499 = vld [vmem:[#allocation13 + $0x30] sm:$0xf]
    %v500 = vld [vmem:[#allocation13 + $0x34] sm:$0xf]
    %v501 = vld [vmem:[#allocation13 + $0x38] sm:$0xf]
    %v502 = vld [vmem:[#allocation13 + $0x3c] sm:$0xf]
    %v503 = vld [vmem:[%s9] sm:$0x1]
    %v505 = vlaneseq
    %v506 = vshrl.u32 %v505, 7
    %v507 = vsub.s32 0, %v506
    %v508 = vrot.slane %v503, %v507
    %v526 = vunpack.c.l.b16 %v487
    %v527 = vunpack.c.l.b16 %v488
    %v528 = vunpack.c.l.b16 %v489
    %v529 = vunpack.c.l.b16 %v490
    %v530 = vunpack.c.l.b16 %v491
    %v531 = vunpack.c.l.b16 %v492
    %v532 = vunpack.c.l.b16 %v493
    %v533 = vunpack.c.l.b16 %v494
    %v534 = vunpack.c.l.b16 %v495
    %v535 = vunpack.c.l.b16 %v496
    %v536 = vunpack.c.l.b16 %v497
    %v537 = vunpack.c.l.b16 %v498
    %v538 = vunpack.c.l.b16 %v499
    %v539 = vunpack.c.l.b16 %v500
    %v540 = vunpack.c.l.b16 %v501
    %v541 = vunpack.c.l.b16 %v502
    %v542 = vpack.c.b16 %v527, %v526
    %v543 = vpack.c.b16 %v529, %v528
    %v544 = vpack.c.b16 %v531, %v530
    %v545 = vpack.c.b16 %v533, %v532
    %v546 = vpack.c.b16 %v535, %v534
    %v547 = vpack.c.b16 %v537, %v536
    %v548 = vpack.c.b16 %v539, %v538
    %v549 = vpack.c.b16 %v541, %v540
    %558 = vmatprep.subr.bf16.mxu0 0
    %559 = vmatpush1.bf16.msra.mxu0 %v549
    %560 = vmatprep.subr.bf16.mxu0 0
    %561 = vmatpush1.bf16.msra.mxu0 %v548
    %562 = vmatprep.subr.bf16.mxu0 0
    %563 = vmatpush1.bf16.msra.mxu0 %v547
    %564 = vmatprep.subr.bf16.mxu0 0
    %565 = vmatpush1.bf16.msra.mxu0 %v546
    %566 = vmatprep.subr.bf16.mxu0 0
    %567 = vmatpush1.bf16.msra.mxu0 %v545
    %568 = vmatprep.subr.bf16.mxu0 0
    %569 = vmatpush1.bf16.msra.mxu0 %v544
    %570 = vmatprep.subr.bf16.mxu0 0
    %571 = vmatpush1.bf16.msra.mxu0 %v543
    %572 = vmatprep.subr.bf16.mxu0 0
    %573 = vmatpush1.bf16.msra.mxu0 %v542
    %574 = vmatprep.subr.bf16.mxu0 0
    %575 = vmatpush2.bf16.msra.mxu0 0
    %576 = vmatprep.subr.bf16.mxu0 0
    %577 = vmatpush2.bf16.msra.mxu0 0
    %578 = vmatprep.subr.bf16.mxu0 0
    %579 = vmatpush2.bf16.msra.mxu0 0
    %580 = vmatprep.subr.bf16.mxu0 0
    %581 = vmatpush2.bf16.msra.mxu0 0
    %582 = vmatprep.subr.bf16.mxu0 0
    %583 = vmatpush2.bf16.msra.mxu0 0
    %584 = vmatprep.subr.bf16.mxu0 0
    %585 = vmatpush2.bf16.msra.mxu0 0
    %586 = vmatprep.subr.bf16.mxu0 0
    %587 = vmatpush2.bf16.msra.mxu0 0
    %588 = vmatprep.subr.bf16.mxu0 0
    %589 = vmatpush2.bf16.msra.mxu0 0
    %590 = vmatprep.mubr.bf16.mxu0 0
    %591 = vmatmul.mubr.bf16.gmra.mxu0 %v486
    %v592 = vpop.f32.mrf.mxu0
    %v593 = vadd.f32 %v508, %v592
    %v594 = vpop.f32.mrf.mxu0
    %v595 = vpop.f32.mrf.mxu0
    %v596 = vadd.f32 %v508, %v595
    %v597 = vpop.f32.mrf.mxu0
    %598 = vdwg.mxu0
    %v599 = vtanh.pop %v593
    %v600 = vtanh.pop %v596
    %v601 = vld [vmem:[%s10] sm:$0x1]
    %v603 = vlaneseq
    %v604 = vshrl.u32 %v603, 7
    %v605 = vsub.s32 0, %v604
    %v606 = vrot.slane %v601, %v605
    %v608 = vmul.f32 %v599, %v606
    %v609 = vmul.f32 %v600, %v606
    %610 = vadd.xlane.f32.xlu0 %v608
    %v611 = vpop.xlane.xlu0 %610
    %612 = vadd.xlane.f32.xlu0 %v609
    %v613 = vpop.xlane.xlu0 %612
    %v614 = vlaneseq
    %v615 = vshrl.u32 %v614, 7
    %s616 = smul.u32 0, 8
    %v617 = vstv %s616
    %v618 = vadd.s32 %v615, %v617
    %vm619 = vcmp.lt.s32.totalorder %v618, 8
    %v620 = vsel %vm619, %v611, -1e+30
    %v621 = vrot.slane %v620, 4
    %v622 = vmax.f32 %v620, %v621
    %v623 = vrot.slane %v622, 2
    %v624 = vmax.f32 %v622, %v623
    %v625 = vrot.slane %v624, 1
    %v626 = vmax.f32 %v624, %v625
    %v627 = vsel %vm619, %v613, -1e+30
    %v628 = vrot.slane %v627, 4
    %v629 = vmax.f32 %v627, %v628
    %v630 = vrot.slane %v629, 2
    %v631 = vmax.f32 %v629, %v630
    %v632 = vrot.slane %v631, 1
    %v633 = vmax.f32 %v631, %v632
    %vm634 = vcmask 1040384
    %v635 = vsel %vm634, %v626, %v633
    %v636 = vld [vmem:[#allocation2] sm:$0x3]
    %v637 = vmax.f32 %v636, %v635
    %v638 = vsub.f32 %v636, %v637
    %v639 = vmul.f32 %v638, 1.442695
    %v640 = vpow.pop %v639
    %v641 = vlaneseq
    %v642 = vshrl.u32 %v641, 7
    %v643 = vsub.s32 0, %v642
    %v644 = vrot.slane %v637, %v643
    %v645 = vsub.f32 %v611, %v644
    %v646 = vmul.f32 %v645, 1.442695
    %v647 = vpow.pop %v646
    %v648 = vsel %vm619, %v647, 0.0
    %v649 = vlaneseq
    %v650 = vshrl.u32 %v649, 7
    %v651 = vsub.s32 1, %v650
    %v652 = vrot.slane %v637, %v651
    %v653 = vsub.f32 %v613, %v652
    %v654 = vmul.f32 %v653, 1.442695
    %v655 = vpow.pop %v654
    %v656 = vsel %vm619, %v655, 0.0
    %658 = vset.pattern.permute.xlu0 0
    %659 = vperm.xlu0 %658, %v648
    %v660 = vpop.permute.xlu0 %659
    %663 = vset.pattern.permute.xlu0 0
    %664 = vperm.xlu0 %663, %v656
    %v665 = vpop.permute.xlu0 %664
    %v667 = vmul.f32 %v660, %v480
    %v668 = vmul.f32 %v665, %v483
    %v669 = vpack.c.bf16 %v668, %v667
    %v670 = vpack.c.bf16 %v665, %v660
    %v671 = vld [vmem:[%s1] sm:$0x1]
    %vm672 = vcmask 130048
    %v674 = vsel %vm672, %v671, 0
    %676 = vmatprep.subr.bf16.mxu0 0
    %677 = vmatpush1.bf16.msra.mxu0 0
    %678 = vmatprep.subr.bf16.mxu0 0
    %679 = vmatpush1.bf16.msra.mxu0 0
    %680 = vmatprep.subr.bf16.mxu0 0
    %681 = vmatpush1.bf16.msra.mxu0 0
    %682 = vmatprep.subr.bf16.mxu0 0
    %683 = vmatpush1.bf16.msra.mxu0 0
    %684 = vmatprep.subr.bf16.mxu0 0
    %685 = vmatpush1.bf16.msra.mxu0 0
    %686 = vmatprep.subr.bf16.mxu0 0
    %687 = vmatpush1.bf16.msra.mxu0 0
    %688 = vmatprep.subr.bf16.mxu0 0
    %689 = vmatpush1.bf16.msra.mxu0 0
    %690 = vmatprep.subr.bf16.mxu0 %v670
    %691 = vmatpush1.bf16.msra.mxu0 %v669
    %692 = vmatprep.subr.bf16.mxu0 0
    %693 = vmatpush2.bf16.msra.mxu0 0
    %694 = vmatprep.subr.bf16.mxu0 0
    %695 = vmatpush2.bf16.msra.mxu0 0
    %696 = vmatprep.subr.bf16.mxu0 0
    %697 = vmatpush2.bf16.msra.mxu0 0
    %698 = vmatprep.subr.bf16.mxu0 0
    %699 = vmatpush2.bf16.msra.mxu0 0
    %700 = vmatprep.subr.bf16.mxu0 0
    %701 = vmatpush2.bf16.msra.mxu0 0
    %702 = vmatprep.subr.bf16.mxu0 0
    %703 = vmatpush2.bf16.msra.mxu0 0
    %704 = vmatprep.subr.bf16.mxu0 0
    %705 = vmatpush2.bf16.msra.mxu0 0
    %706 = vmatprep.subr.bf16.mxu0 0
    %707 = vmatpush2.bf16.msra.mxu0 0
    %708 = vmatprep.mubr.bf16.mxu0 0
    %709 = vmatmul.mubr.bf16.gmra.mxu0 %v674
    %v710 = vpop.f32.mrf.mxu0
    %v711 = vadd.f32 0.0, %v710
    %v712 = vpop.f32.mrf.mxu0
    %v713 = vadd.f32 0.0, %v712
    %v714 = vpop.f32.mrf.mxu0
    %v715 = vpop.f32.mrf.mxu0
    %716 = vdwg.mxu0
    %v717 = vld [vmem:[#allocation4] sm:$0x3]
    %719 = vset.pattern.permute.xlu0 0
    %720 = vperm.xlu0 %719, %v640
    %v721 = vpop.permute.xlu0 %720
    %v723 = vmul.f32 %v717, %v721
    %v724 = vadd.f32 %v723, %v711
    %725 = vst [vmem:[#allocation4] sm:$0x3] %v724
    %v726 = vld [vmem:[#allocation3] sm:$0x3]
    %v727 = vmul.f32 %v726, %v640
    %v728 = vadd.f32 %v727, %v713
    %vm729 = vcmask 1024
    %730 = vst.msk [vmem:[#allocation3] sm:$0x3] %vm729, %v728
    %731 = vst.msk [vmem:[#allocation2] sm:$0x3] %vm729, %v637
    // Predicated region
    $region82: #{tpu_custom_call.1} parent=1 // pred_check
      %p732 = pneg %p128
    $region83: #{tpu_custom_call.1} parent=1 // pred_check_branch
      %734 = sbr.rel (%p732) target = $region85
    $region84: #{tpu_custom_call.1} parent=1 // pred_region
      %v735 = vld [vmem:[#allocation4] sm:$0x3]
      %v736 = vld [vmem:[#allocation3] sm:$0x3]
      %738 = vset.pattern.permute.xlu0 0
      %739 = vperm.xlu0 %738, %v736
      %v740 = vpop.permute.xlu0 %739
      %v742 = vrcp.pop %v740
      %v743 = vmul.f32 %v735, %v742
      %v744 = vpack.c.bf16 %v743, %v743
      %v745 = vld [vmem:[#allocation14] sm:$0xf]
      %v746 = vld [vmem:[#allocation14 + $0x4] sm:$0xf]
      %v747 = vld [vmem:[#allocation14 + $0x8] sm:$0xf]
      %v748 = vld [vmem:[#allocation14 + $0xc] sm:$0xf]
      %v749 = vld [vmem:[#allocation14 + $0x10] sm:$0xf]
      %v750 = vld [vmem:[#allocation14 + $0x14] sm:$0xf]
      %v751 = vld [vmem:[#allocation14 + $0x18] sm:$0xf]
      %v752 = vld [vmem:[#allocation14 + $0x1c] sm:$0xf]
      %v753 = vld [vmem:[#allocation14 + $0x20] sm:$0xf]
      %v754 = vld [vmem:[#allocation14 + $0x24] sm:$0xf]
      %v755 = vld [vmem:[#allocation14 + $0x28] sm:$0xf]
      %v756 = vld [vmem:[#allocation14 + $0x2c] sm:$0xf]
      %v757 = vld [vmem:[#allocation14 + $0x30] sm:$0xf]
      %v758 = vld [vmem:[#allocation14 + $0x34] sm:$0xf]
      %v759 = vld [vmem:[#allocation14 + $0x38] sm:$0xf]
      %v760 = vld [vmem:[#allocation14 + $0x3c] sm:$0xf]
      %v761 = vld [vmem:[%s12] sm:$0x1]
      %v763 = vlaneseq
      %v764 = vshrl.u32 %v763, 7
      %v765 = vsub.s32 0, %v764
      %v766 = vrot.slane %v761, %v765
      %v784 = vunpack.c.l.b16 %v745
      %v785 = vunpack.c.l.b16 %v746
      %v786 = vunpack.c.l.b16 %v747
      %v787 = vunpack.c.l.b16 %v748
      %v788 = vunpack.c.l.b16 %v749
      %v789 = vunpack.c.l.b16 %v750
      %v790 = vunpack.c.l.b16 %v751
      %v791 = vunpack.c.l.b16 %v752
      %v792 = vunpack.c.l.b16 %v753
      %v793 = vunpack.c.l.b16 %v754
      %v794 = vunpack.c.l.b16 %v755
      %v795 = vunpack.c.l.b16 %v756
      %v796 = vunpack.c.l.b16 %v757
      %v797 = vunpack.c.l.b16 %v758
      %v798 = vunpack.c.l.b16 %v759
      %v799 = vunpack.c.l.b16 %v760
      %v800 = vpack.c.b16 %v785, %v784
      %v801 = vpack.c.b16 %v787, %v786
      %v802 = vpack.c.b16 %v789, %v788
      %v803 = vpack.c.b16 %v791, %v790
      %v804 = vpack.c.b16 %v793, %v792
      %v805 = vpack.c.b16 %v795, %v794
      %v806 = vpack.c.b16 %v797, %v796
      %v807 = vpack.c.b16 %v799, %v798
      %816 = vmatprep.subr.bf16.mxu0 0
      %817 = vmatpush1.bf16.msra.mxu0 %v807
      %818 = vmatprep.subr.bf16.mxu0 0
      %819 = vmatpush1.bf16.msra.mxu0 %v806
      %820 = vmatprep.subr.bf16.mxu0 0
      %821 = vmatpush1.bf16.msra.mxu0 %v805
      %822 = vmatprep.subr.bf16.mxu0 0
      %823 = vmatpush1.bf16.msra.mxu0 %v804
      %824 = vmatprep.subr.bf16.mxu0 0
      %825 = vmatpush1.bf16.msra.mxu0 %v803
      %826 = vmatprep.subr.bf16.mxu0 0
      %827 = vmatpush1.bf16.msra.mxu0 %v802
      %828 = vmatprep.subr.bf16.mxu0 0
      %829 = vmatpush1.bf16.msra.mxu0 %v801
      %830 = vmatprep.subr.bf16.mxu0 0
      %831 = vmatpush1.bf16.msra.mxu0 %v800
      %832 = vmatprep.subr.bf16.mxu0 0
      %833 = vmatpush2.bf16.msra.mxu0 0
      %834 = vmatprep.subr.bf16.mxu0 0
      %835 = vmatpush2.bf16.msra.mxu0 0
      %836 = vmatprep.subr.bf16.mxu0 0
      %837 = vmatpush2.bf16.msra.mxu0 0
      %838 = vmatprep.subr.bf16.mxu0 0
      %839 = vmatpush2.bf16.msra.mxu0 0
      %840 = vmatprep.subr.bf16.mxu0 0
      %841 = vmatpush2.bf16.msra.mxu0 0
      %842 = vmatprep.subr.bf16.mxu0 0
      %843 = vmatpush2.bf16.msra.mxu0 0
      %844 = vmatprep.subr.bf16.mxu0 0
      %845 = vmatpush2.bf16.msra.mxu0 0
      %846 = vmatprep.subr.bf16.mxu0 0
      %847 = vmatpush2.bf16.msra.mxu0 0
      %848 = vmatprep.mubr.bf16.mxu0 0
      %849 = vmatmul.mubr.bf16.gmra.mxu0 %v744
      %v850 = vpop.f32.mrf.mxu0
      %v851 = vadd.f32 %v766, %v850
      %v852 = vpop.f32.mrf.mxu0
      %v853 = vpop.f32.mrf.mxu0
      %v854 = vpop.f32.mrf.mxu0
      %855 = vdwg.mxu0
      %856 = vst [vmem:[#allocation16] sm:$0x3] %v851
    $region85: #{tpu_custom_call.1} parent=1 // pred_fallthru
      _
    // Predicated region
    $region86: #{tpu_custom_call.1} parent=1 // pred_check
      _
    $region87: #{tpu_custom_call.1} parent=1 // pred_check_branch
      %858 = sbr.rel (0) target = $region89
    $region88: #{tpu_custom_call.1} parent=1 // pred_region
      %s860 = ssub.s32 32, 32
      %861 = vsyncadd [#allocation7], %s860
      %s863 = sshll.u32 [#allocation16], 4
      %s864 = int_to_ptr.vmem [resolvable:$true] %s863
      %866 = dma.vmem_to_hbm [thread:$0]  %s864, 32, %s13, [#allocation7]
    $region89: #{tpu_custom_call.1} parent=1 // pred_fallthru
      _
    // Predicated region
    $region90: #{tpu_custom_call.1} parent=1 // pred_check
      _
    $region91: #{tpu_custom_call.1} parent=1 // pred_check_branch
      %868 = sbr.rel (0) target = $region93
    $region92: #{tpu_custom_call.1} parent=1 // pred_region
      %869 = dma.done [#allocation7], 32
    $region93: #{tpu_custom_call.1} parent=1 // pred_fallthru
      _
    %870 = vsyncpa [#allocation6], 1
    %871 = vsyncpa [#allocation9], 1
    %872 = vsyncpa [#allocation12], 1
    %873 = vsyncpa [#allocation15], 1
    %874 = vsyncpa [#allocation7], 1

</llo_original>
